<compile_context>
chip_gen: v6e
topology: v6e:2x2x1
jax: 0.10.0
libtpu: 0.0.40
codegen_flags: <defaults>
</compile_context>

<pallas_src>
import functools

import jax
import jax.numpy as jnp
from jax.experimental import pallas as pl
from jax.experimental.pallas import tpu as pltpu


# MXU operand dtype for the recurrent h @ W_hh matmul (accumulation is always
# f32). bf16 is the review-recommended setting for v6e/v7x and is also fine on
# v5e (only MXU operands narrowed). Use jnp.float32 for bit-strict f32 runs.
RECURRENT_MXU_DTYPE = jnp.bfloat16


def lstm_q_kernel(x_ref, wih_ref, whh_ref, b_ref, wq_ref, bq_ref, q_ref,
                  *, seq_len):
    """Full LSTM recurrence + final linear projection, all resident in VMEM.

    x_ref   : (T*Bp, Din)   time-major input, batch padded to Bp, flattened
    wih_ref : (Din, 4H)     transposed weight_ih_l0 (f32)
    whh_ref : (H, 4H)       transposed weight_hh_l0 (RECURRENT_MXU_DTYPE)
    b_ref   : (1, 4H)       bias_ih_l0 + bias_hh_l0 (f32)
    wq_ref  : (H, Op)       transposed + lane-padded q_layer.weight (f32)
    bq_ref  : (1, Op)       lane-padded q_layer.bias (f32)
    q_ref   : (Bp, Op)      output Q-values (padded; wrapper slices)
    """
    T = seq_len
    Bp = q_ref.shape[0]
    H = whh_ref.shape[0]
    H4 = 4 * H

    # ---- hoisted input projection: one matmul + one bias add for all steps.
    gx = (
        jnp.dot(x_ref[...], wih_ref[...], preferred_element_type=jnp.float32)
        + b_ref[...]
    )                                                     # (T*Bp, 4H) f32

    # ---- recurrent weight resident in vregs across the (unrolled) recurrence.
    whh = whh_ref[...]                                    # (H, 4H) bf16/f32

    # Static lane constants for the single-sigmoid gate trick:
    #   non-g lanes: sigmoid(x)            (gmul = 1, goff = 0)
    #   g lanes:     tanh(x)=2*sig(2x)-1   (gmul = 2, goff = 1)
    lane = jax.lax.broadcasted_iota(jnp.int32, (Bp, H4), 1)
    g_mask = (lane >= 2 * H) & (lane < 3 * H)
    gmul = jnp.where(g_mask, 2.0, 1.0).astype(jnp.float32)
    goff = jnp.where(g_mask, 1.0, 0.0).astype(jnp.float32)

    h = jnp.zeros((Bp, H), jnp.float32)
    c = jnp.zeros((Bp, H), jnp.float32)

    # T is small and static -> fully unrolled; h/c stay in registers.
    for t in range(T):
        # One MXU push per step; bf16 operands, f32 accumulation.
        gates = gx[t * Bp:(t + 1) * Bp, :] + jnp.dot(
            h.astype(whh.dtype), whh,
            preferred_element_type=jnp.float32)           # (Bp, 4H) f32
        # Single full-width EUP sigmoid; g lanes fixed up with cheap VPU ops.
        s = jax.nn.sigmoid(gates * gmul)
        act = s * gmul - goff
        i = act[:, 0 * H:1 * H]
        f = act[:, 1 * H:2 * H]
        g = act[:, 2 * H:3 * H]
        o = act[:, 3 * H:4 * H]
        c = f * c + i * g
        h = o * jnp.tanh(c)

    # q_layer on the last hidden state (lane-dense padded output slab, f32).
    q_ref[...] = (
        jnp.dot(h, wq_ref[...], preferred_element_type=jnp.float32)
        + bq_ref[...]
    ).astype(q_ref.dtype)


def prepare_params(w_ih, w_hh, b_ih, b_hh, w_q, b_q):
    """One-time (init-time) weight preprocessing: transpose / fuse / pad / cast.

    Keeps the per-call wrapper free of transpose/pad HLOs (perf review item).
    """
    H4, _ = w_ih.shape
    H = H4 // 4
    O = w_q.shape[0]
    Op = max(128, ((O + 127) // 128) * 128)

    return {
        "wih_t": jnp.transpose(w_ih).astype(jnp.float32),              # (Din, 4H)
        "whh_t": jnp.transpose(w_hh).astype(RECURRENT_MXU_DTYPE),      # (H, 4H)
        "b": (b_ih + b_hh).reshape(1, H4).astype(jnp.float32),         # (1, 4H)
        "wq_t": jnp.pad(jnp.transpose(w_q),
                        ((0, 0), (0, Op - O))).astype(jnp.float32),    # (H, Op)
        "bq": jnp.pad(b_q, (0, Op - O)).reshape(1, Op).astype(jnp.float32),
        "hidden_dim": H,
        "out_dim": O,
        "out_dim_padded": Op,
    }


def make_lstm_q_forward(params):
    """Build a jitted forward; the prepared weights are jit-time constants."""
    wih_t = params["wih_t"]
    whh_t = params["whh_t"]
    b = params["b"]
    wq_t = params["wq_t"]
    bq = params["bq"]
    O = params["out_dim"]
    Op = params["out_dim_padded"]

    @jax.jit
    def forward(x_btd):
        """x_btd: (B, T, Din) float32 (batch_first, like the PyTorch module)."""
        B, T, Din = x_btd.shape
        # Pad batch to a full f32 sublane group so the recurrence tiles cleanly.
        Bp = max(8, ((B + 7) // 8) * 8)

        # Tiny per-call glue: layout + batch padding of x only.
        x_tbd = jnp.transpose(x_btd, (1, 0, 2))                 # (T, B, Din)
        x_tbd = jnp.pad(x_tbd, ((0, 0), (0, Bp - B), (0, 0)))   # (T, Bp, Din)
        x_2d = x_tbd.reshape(T * Bp, Din).astype(jnp.float32)   # (T*Bp, Din)

        vmem = pl.BlockSpec(memory_space=pltpu.MemorySpace.VMEM)
        q_pad = pl.pallas_call(
            functools.partial(lstm_q_kernel, seq_len=T),
            out_shape=jax.ShapeDtypeStruct((Bp, Op), jnp.float32),
            in_specs=[vmem] * 6,
            out_specs=vmem,
        )(x_2d, wih_t, whh_t, b, wq_t, bq)

        return q_pad[:B, :O]

    return forward


def lstm_q_reference(x_btd, w_ih, w_hh, b_ih, b_hh, w_q, b_q):
    """Pure-JAX f32 reference matching torch.nn.LSTM + Linear semantics."""
    B, T, Din = x_btd.shape
    H = w_hh.shape[1]
    h = jnp.zeros((B, H), jnp.float32)
    c = jnp.zeros((B, H), jnp.float32)
    for t in range(T):
        xt = x_btd[:, t, :]
        gates = xt @ w_ih.T + h @ w_hh.T + b_ih + b_hh
        i = jax.nn.sigmoid(gates[:, 0 * H:1 * H])
        f = jax.nn.sigmoid(gates[:, 1 * H:2 * H])
        g = jnp.tanh(gates[:, 2 * H:3 * H])
        o = jax.nn.sigmoid(gates[:, 3 * H:4 * H])
        c = f * c + i * g
        h = o * jnp.tanh(c)
    return h @ w_q.T + b_q


if __name__ == "__main__":
    # Shapes consistent with the module: x (batch=2, seq=8, input_dim=16),
    # hidden_dim=32, output_dim=4.
    B, T, Din, H, O = 2, 8, 16, 32, 4

    key = jax.random.PRNGKey(0)
    ks = jax.random.split(key, 7)
    scale = 1.0 / jnp.sqrt(H)

    x = jax.random.normal(ks[0], (B, T, Din), jnp.float32)
    w_ih = jax.random.uniform(ks[1], (4 * H, Din), jnp.float32, -scale, scale)
    w_hh = jax.random.uniform(ks[2], (4 * H, H), jnp.float32, -scale, scale)
    b_ih = jax.random.uniform(ks[3], (4 * H,), jnp.float32, -scale, scale)
    b_hh = jax.random.uniform(ks[4], (4 * H,), jnp.float32, -scale, scale)
    w_q = jax.random.uniform(ks[5], (O, H), jnp.float32, -scale, scale)
    b_q = jax.random.uniform(ks[6], (O,), jnp.float32, -scale, scale)

    params = prepare_params(w_ih, w_hh, b_ih, b_hh, w_q, b_q)   # init-time, once
    forward = make_lstm_q_forward(params)

    q = forward(x)
    q = jax.block_until_ready(q)

    q_ref = lstm_q_reference(x, w_ih, w_hh, b_ih, b_hh, w_q, b_q)
    assert q.shape == (B, O)
    # Tolerance relaxed from 1e-5 because the recurrent matmul uses bf16 MXU
    # operands (f32 accumulation) per the perf review; f32 reference retained.
    assert jnp.allclose(q, q_ref, atol=5e-3, rtol=5e-3), "mismatch vs reference"

    print("KERNEL_OK")
</pallas_src>

<mosaic_0001>
module attributes {stable_mosaic.version = 11 : i64} {
  func.func @lstm_q_kernel(%arg0: memref<64x16xf32, #tpu.memory_space<vmem>>, %arg1: memref<16x128xf32, #tpu.memory_space<vmem>>, %arg2: memref<32x128xbf16, #tpu.memory_space<vmem>>, %arg3: memref<1x128xf32, #tpu.memory_space<vmem>>, %arg4: memref<32x128xf32, #tpu.memory_space<vmem>>, %arg5: memref<1x128xf32, #tpu.memory_space<vmem>>, %arg6: memref<8x128xf32, #tpu.memory_space<vmem>>) attributes {dimension_semantics = [], scalar_prefetch = 0 : i64, scratch_operands = 0 : i64, tpu.core_type = #tpu.core_type<tc>} {
    %c0 = arith.constant 0 : index
    %c0_0 = arith.constant 0 : index
    %0 = vector.load %arg0[%c0, %c0_0] : memref<64x16xf32, #tpu.memory_space<vmem>>, vector<64x16xf32>
    %c0_1 = arith.constant 0 : index
    %c0_2 = arith.constant 0 : index
    %1 = vector.load %arg1[%c0_1, %c0_2] : memref<16x128xf32, #tpu.memory_space<vmem>>, vector<16x128xf32>
    %cst = arith.constant dense<0.000000e+00> : vector<64x128xf32>
    %2 = tpu.matmul %0, %1, %cst {dimension_numbers = #tpu.dot_dimension_numbers<[1], [0], [0], [1], [0, 0, 1, 1], [], []>} : vector<64x16xf32>, vector<16x128xf32>, vector<64x128xf32> -> vector<64x128xf32>
    %c0_3 = arith.constant 0 : index
    %c0_4 = arith.constant 0 : index
    %3 = vector.load %arg3[%c0_3, %c0_4] : memref<1x128xf32, #tpu.memory_space<vmem>>, vector<1x128xf32>
    %4 = vector.broadcast %3 : vector<1x128xf32> to vector<64x128xf32>
    %5 = arith.addf %2, %4 : vector<64x128xf32>
    %c0_5 = arith.constant 0 : index
    %c0_6 = arith.constant 0 : index
    %6 = vector.load %arg2[%c0_5, %c0_6] : memref<32x128xbf16, #tpu.memory_space<vmem>>, vector<32x128xbf16>
    %7 = tpu.iota {dimensions = array<i32: 1>} : vector<8x128xi32>
    %c64_i32 = arith.constant 64 : i32
    %8 = vector.broadcast %c64_i32 : i32 to vector<8x128xi32>
    %9 = arith.cmpi sge, %7, %8 : vector<8x128xi32>
    %c96_i32 = arith.constant 96 : i32
    %10 = vector.broadcast %c96_i32 : i32 to vector<8x128xi32>
    %11 = arith.cmpi slt, %7, %10 : vector<8x128xi32>
    %12 = arith.andi %9, %11 : vector<8x128xi1>
    %cst_7 = arith.constant 2.000000e+00 : f32
    %cst_8 = arith.constant 1.000000e+00 : f32
    %13 = vector.broadcast %cst_7 : f32 to vector<8x128xf32>
    %14 = vector.broadcast %cst_8 : f32 to vector<8x128xf32>
    %15 = arith.select %12, %13, %14 : vector<8x128xi1>, vector<8x128xf32>
    %cst_9 = arith.constant 1.000000e+00 : f32
    %cst_10 = arith.constant 0.000000e+00 : f32
    %16 = vector.broadcast %cst_9 : f32 to vector<8x128xf32>
    %17 = vector.broadcast %cst_10 : f32 to vector<8x128xf32>
    %18 = arith.select %12, %16, %17 : vector<8x128xi1>, vector<8x128xf32>
    %cst_11 = arith.constant 0.000000e+00 : f32
    %19 = vector.broadcast %cst_11 : f32 to vector<8x32xf32>
    %cst_12 = arith.constant 0.000000e+00 : f32
    %20 = vector.broadcast %cst_12 : f32 to vector<8x32xf32>
    %21 = vector.extract_strided_slice %5 {offsets = [0, 0], sizes = [8, 128], strides = [1, 1]} : vector<64x128xf32> to vector<8x128xf32>
    %22 = arith.truncf %19 : vector<8x32xf32> to vector<8x32xbf16>
    %cst_13 = arith.constant dense<0.000000e+00> : vector<8x128xf32>
    %23 = tpu.matmul %22, %6, %cst_13 {dimension_numbers = #tpu.dot_dimension_numbers<[1], [0], [0], [1], [0, 0, 1, 1], [], []>} : vector<8x32xbf16>, vector<32x128xbf16>, vector<8x128xf32> -> vector<8x128xf32>
    %24 = arith.addf %21, %23 : vector<8x128xf32>
    %25 = arith.mulf %24, %15 : vector<8x128xf32>
    %26 = arith.negf %25 : vector<8x128xf32>
    %27 = math.exp %26 : vector<8x128xf32>
    %cst_14 = arith.constant 1.000000e+00 : f32
    %28 = vector.broadcast %cst_14 : f32 to vector<8x128xf32>
    %29 = arith.addf %28, %27 : vector<8x128xf32>
    %30 = arith.divf %28, %29 : vector<8x128xf32>
    %31 = arith.mulf %30, %15 : vector<8x128xf32>
    %32 = arith.subf %31, %18 : vector<8x128xf32>
    %33 = vector.extract_strided_slice %32 {offsets = [0, 0], sizes = [8, 32], strides = [1, 1]} : vector<8x128xf32> to vector<8x32xf32>
    %34 = vector.extract_strided_slice %32 {offsets = [0, 32], sizes = [8, 32], strides = [1, 1]} : vector<8x128xf32> to vector<8x32xf32>
    %35 = vector.extract_strided_slice %32 {offsets = [0, 64], sizes = [8, 32], strides = [1, 1]} : vector<8x128xf32> to vector<8x32xf32>
    %36 = vector.extract_strided_slice %32 {offsets = [0, 96], sizes = [8, 32], strides = [1, 1]} : vector<8x128xf32> to vector<8x32xf32>
    %37 = arith.mulf %34, %20 : vector<8x32xf32>
    %38 = arith.mulf %33, %35 : vector<8x32xf32>
    %39 = arith.addf %37, %38 : vector<8x32xf32>
    %40 = math.tanh %39 : vector<8x32xf32>
    %41 = arith.mulf %36, %40 : vector<8x32xf32>
    %42 = vector.extract_strided_slice %5 {offsets = [8, 0], sizes = [8, 128], strides = [1, 1]} : vector<64x128xf32> to vector<8x128xf32>
    %43 = arith.truncf %41 : vector<8x32xf32> to vector<8x32xbf16>
    %cst_15 = arith.constant dense<0.000000e+00> : vector<8x128xf32>
    %44 = tpu.matmul %43, %6, %cst_15 {dimension_numbers = #tpu.dot_dimension_numbers<[1], [0], [0], [1], [0, 0, 1, 1], [], []>} : vector<8x32xbf16>, vector<32x128xbf16>, vector<8x128xf32> -> vector<8x128xf32>
    %45 = arith.addf %42, %44 : vector<8x128xf32>
    %46 = arith.mulf %45, %15 : vector<8x128xf32>
    %47 = arith.negf %46 : vector<8x128xf32>
    %48 = math.exp %47 : vector<8x128xf32>
    %cst_16 = arith.constant 1.000000e+00 : f32
    %49 = vector.broadcast %cst_16 : f32 to vector<8x128xf32>
    %50 = arith.addf %49, %48 : vector<8x128xf32>
    %51 = arith.divf %49, %50 : vector<8x128xf32>
    %52 = arith.mulf %51, %15 : vector<8x128xf32>
    %53 = arith.subf %52, %18 : vector<8x128xf32>
    %54 = vector.extract_strided_slice %53 {offsets = [0, 0], sizes = [8, 32], strides = [1, 1]} : vector<8x128xf32> to vector<8x32xf32>
    %55 = vector.extract_strided_slice %53 {offsets = [0, 32], sizes = [8, 32], strides = [1, 1]} : vector<8x128xf32> to vector<8x32xf32>
    %56 = vector.extract_strided_slice %53 {offsets = [0, 64], sizes = [8, 32], strides = [1, 1]} : vector<8x128xf32> to vector<8x32xf32>
    %57 = vector.extract_strided_slice %53 {offsets = [0, 96], sizes = [8, 32], strides = [1, 1]} : vector<8x128xf32> to vector<8x32xf32>
    %58 = arith.mulf %55, %39 : vector<8x32xf32>
    %59 = arith.mulf %54, %56 : vector<8x32xf32>
    %60 = arith.addf %58, %59 : vector<8x32xf32>
    %61 = math.tanh %60 : vector<8x32xf32>
    %62 = arith.mulf %57, %61 : vector<8x32xf32>
    %63 = vector.extract_strided_slice %5 {offsets = [16, 0], sizes = [8, 128], strides = [1, 1]} : vector<64x128xf32> to vector<8x128xf32>
    %64 = arith.truncf %62 : vector<8x32xf32> to vector<8x32xbf16>
    %cst_17 = arith.constant dense<0.000000e+00> : vector<8x128xf32>
    %65 = tpu.matmul %64, %6, %cst_17 {dimension_numbers = #tpu.dot_dimension_numbers<[1], [0], [0], [1], [0, 0, 1, 1], [], []>} : vector<8x32xbf16>, vector<32x128xbf16>, vector<8x128xf32> -> vector<8x128xf32>
    %66 = arith.addf %63, %65 : vector<8x128xf32>
    %67 = arith.mulf %66, %15 : vector<8x128xf32>
    %68 = arith.negf %67 : vector<8x128xf32>
    %69 = math.exp %68 : vector<8x128xf32>
    %cst_18 = arith.constant 1.000000e+00 : f32
    %70 = vector.broadcast %cst_18 : f32 to vector<8x128xf32>
    %71 = arith.addf %70, %69 : vector<8x128xf32>
    %72 = arith.divf %70, %71 : vector<8x128xf32>
    %73 = arith.mulf %72, %15 : vector<8x128xf32>
    %74 = arith.subf %73, %18 : vector<8x128xf32>
    %75 = vector.extract_strided_slice %74 {offsets = [0, 0], sizes = [8, 32], strides = [1, 1]} : vector<8x128xf32> to vector<8x32xf32>
    %76 = vector.extract_strided_slice %74 {offsets = [0, 32], sizes = [8, 32], strides = [1, 1]} : vector<8x128xf32> to vector<8x32xf32>
    %77 = vector.extract_strided_slice %74 {offsets = [0, 64], sizes = [8, 32], strides = [1, 1]} : vector<8x128xf32> to vector<8x32xf32>
    %78 = vector.extract_strided_slice %74 {offsets = [0, 96], sizes = [8, 32], strides = [1, 1]} : vector<8x128xf32> to vector<8x32xf32>
    %79 = arith.mulf %76, %60 : vector<8x32xf32>
    %80 = arith.mulf %75, %77 : vector<8x32xf32>
    %81 = arith.addf %79, %80 : vector<8x32xf32>
    %82 = math.tanh %81 : vector<8x32xf32>
    %83 = arith.mulf %78, %82 : vector<8x32xf32>
    %84 = vector.extract_strided_slice %5 {offsets = [24, 0], sizes = [8, 128], strides = [1, 1]} : vector<64x128xf32> to vector<8x128xf32>
    %85 = arith.truncf %83 : vector<8x32xf32> to vector<8x32xbf16>
    %cst_19 = arith.constant dense<0.000000e+00> : vector<8x128xf32>
    %86 = tpu.matmul %85, %6, %cst_19 {dimension_numbers = #tpu.dot_dimension_numbers<[1], [0], [0], [1], [0, 0, 1, 1], [], []>} : vector<8x32xbf16>, vector<32x128xbf16>, vector<8x128xf32> -> vector<8x128xf32>
    %87 = arith.addf %84, %86 : vector<8x128xf32>
    %88 = arith.mulf %87, %15 : vector<8x128xf32>
    %89 = arith.negf %88 : vector<8x128xf32>
    %90 = math.exp %89 : vector<8x128xf32>
    %cst_20 = arith.constant 1.000000e+00 : f32
    %91 = vector.broadcast %cst_20 : f32 to vector<8x128xf32>
    %92 = arith.addf %91, %90 : vector<8x128xf32>
    %93 = arith.divf %91, %92 : vector<8x128xf32>
    %94 = arith.mulf %93, %15 : vector<8x128xf32>
    %95 = arith.subf %94, %18 : vector<8x128xf32>
    %96 = vector.extract_strided_slice %95 {offsets = [0, 0], sizes = [8, 32], strides = [1, 1]} : vector<8x128xf32> to vector<8x32xf32>
    %97 = vector.extract_strided_slice %95 {offsets = [0, 32], sizes = [8, 32], strides = [1, 1]} : vector<8x128xf32> to vector<8x32xf32>
    %98 = vector.extract_strided_slice %95 {offsets = [0, 64], sizes = [8, 32], strides = [1, 1]} : vector<8x128xf32> to vector<8x32xf32>
    %99 = vector.extract_strided_slice %95 {offsets = [0, 96], sizes = [8, 32], strides = [1, 1]} : vector<8x128xf32> to vector<8x32xf32>
    %100 = arith.mulf %97, %81 : vector<8x32xf32>
    %101 = arith.mulf %96, %98 : vector<8x32xf32>
    %102 = arith.addf %100, %101 : vector<8x32xf32>
    %103 = math.tanh %102 : vector<8x32xf32>
    %104 = arith.mulf %99, %103 : vector<8x32xf32>
    %105 = vector.extract_strided_slice %5 {offsets = [32, 0], sizes = [8, 128], strides = [1, 1]} : vector<64x128xf32> to vector<8x128xf32>
    %106 = arith.truncf %104 : vector<8x32xf32> to vector<8x32xbf16>
    %cst_21 = arith.constant dense<0.000000e+00> : vector<8x128xf32>
    %107 = tpu.matmul %106, %6, %cst_21 {dimension_numbers = #tpu.dot_dimension_numbers<[1], [0], [0], [1], [0, 0, 1, 1], [], []>} : vector<8x32xbf16>, vector<32x128xbf16>, vector<8x128xf32> -> vector<8x128xf32>
    %108 = arith.addf %105, %107 : vector<8x128xf32>
    %109 = arith.mulf %108, %15 : vector<8x128xf32>
    %110 = arith.negf %109 : vector<8x128xf32>
    %111 = math.exp %110 : vector<8x128xf32>
    %cst_22 = arith.constant 1.000000e+00 : f32
    %112 = vector.broadcast %cst_22 : f32 to vector<8x128xf32>
    %113 = arith.addf %112, %111 : vector<8x128xf32>
    %114 = arith.divf %112, %113 : vector<8x128xf32>
    %115 = arith.mulf %114, %15 : vector<8x128xf32>
    %116 = arith.subf %115, %18 : vector<8x128xf32>
    %117 = vector.extract_strided_slice %116 {offsets = [0, 0], sizes = [8, 32], strides = [1, 1]} : vector<8x128xf32> to vector<8x32xf32>
    %118 = vector.extract_strided_slice %116 {offsets = [0, 32], sizes = [8, 32], strides = [1, 1]} : vector<8x128xf32> to vector<8x32xf32>
    %119 = vector.extract_strided_slice %116 {offsets = [0, 64], sizes = [8, 32], strides = [1, 1]} : vector<8x128xf32> to vector<8x32xf32>
    %120 = vector.extract_strided_slice %116 {offsets = [0, 96], sizes = [8, 32], strides = [1, 1]} : vector<8x128xf32> to vector<8x32xf32>
    %121 = arith.mulf %118, %102 : vector<8x32xf32>
    %122 = arith.mulf %117, %119 : vector<8x32xf32>
    %123 = arith.addf %121, %122 : vector<8x32xf32>
    %124 = math.tanh %123 : vector<8x32xf32>
    %125 = arith.mulf %120, %124 : vector<8x32xf32>
    %126 = vector.extract_strided_slice %5 {offsets = [40, 0], sizes = [8, 128], strides = [1, 1]} : vector<64x128xf32> to vector<8x128xf32>
    %127 = arith.truncf %125 : vector<8x32xf32> to vector<8x32xbf16>
    %cst_23 = arith.constant dense<0.000000e+00> : vector<8x128xf32>
    %128 = tpu.matmul %127, %6, %cst_23 {dimension_numbers = #tpu.dot_dimension_numbers<[1], [0], [0], [1], [0, 0, 1, 1], [], []>} : vector<8x32xbf16>, vector<32x128xbf16>, vector<8x128xf32> -> vector<8x128xf32>
    %129 = arith.addf %126, %128 : vector<8x128xf32>
    %130 = arith.mulf %129, %15 : vector<8x128xf32>
    %131 = arith.negf %130 : vector<8x128xf32>
    %132 = math.exp %131 : vector<8x128xf32>
    %cst_24 = arith.constant 1.000000e+00 : f32
    %133 = vector.broadcast %cst_24 : f32 to vector<8x128xf32>
    %134 = arith.addf %133, %132 : vector<8x128xf32>
    %135 = arith.divf %133, %134 : vector<8x128xf32>
    %136 = arith.mulf %135, %15 : vector<8x128xf32>
    %137 = arith.subf %136, %18 : vector<8x128xf32>
    %138 = vector.extract_strided_slice %137 {offsets = [0, 0], sizes = [8, 32], strides = [1, 1]} : vector<8x128xf32> to vector<8x32xf32>
    %139 = vector.extract_strided_slice %137 {offsets = [0, 32], sizes = [8, 32], strides = [1, 1]} : vector<8x128xf32> to vector<8x32xf32>
    %140 = vector.extract_strided_slice %137 {offsets = [0, 64], sizes = [8, 32], strides = [1, 1]} : vector<8x128xf32> to vector<8x32xf32>
    %141 = vector.extract_strided_slice %137 {offsets = [0, 96], sizes = [8, 32], strides = [1, 1]} : vector<8x128xf32> to vector<8x32xf32>
    %142 = arith.mulf %139, %123 : vector<8x32xf32>
    %143 = arith.mulf %138, %140 : vector<8x32xf32>
    %144 = arith.addf %142, %143 : vector<8x32xf32>
    %145 = math.tanh %144 : vector<8x32xf32>
    %146 = arith.mulf %141, %145 : vector<8x32xf32>
    %147 = vector.extract_strided_slice %5 {offsets = [48, 0], sizes = [8, 128], strides = [1, 1]} : vector<64x128xf32> to vector<8x128xf32>
    %148 = arith.truncf %146 : vector<8x32xf32> to vector<8x32xbf16>
    %cst_25 = arith.constant dense<0.000000e+00> : vector<8x128xf32>
    %149 = tpu.matmul %148, %6, %cst_25 {dimension_numbers = #tpu.dot_dimension_numbers<[1], [0], [0], [1], [0, 0, 1, 1], [], []>} : vector<8x32xbf16>, vector<32x128xbf16>, vector<8x128xf32> -> vector<8x128xf32>
    %150 = arith.addf %147, %149 : vector<8x128xf32>
    %151 = arith.mulf %150, %15 : vector<8x128xf32>
    %152 = arith.negf %151 : vector<8x128xf32>
    %153 = math.exp %152 : vector<8x128xf32>
    %cst_26 = arith.constant 1.000000e+00 : f32
    %154 = vector.broadcast %cst_26 : f32 to vector<8x128xf32>
    %155 = arith.addf %154, %153 : vector<8x128xf32>
    %156 = arith.divf %154, %155 : vector<8x128xf32>
    %157 = arith.mulf %156, %15 : vector<8x128xf32>
    %158 = arith.subf %157, %18 : vector<8x128xf32>
    %159 = vector.extract_strided_slice %158 {offsets = [0, 0], sizes = [8, 32], strides = [1, 1]} : vector<8x128xf32> to vector<8x32xf32>
    %160 = vector.extract_strided_slice %158 {offsets = [0, 32], sizes = [8, 32], strides = [1, 1]} : vector<8x128xf32> to vector<8x32xf32>
    %161 = vector.extract_strided_slice %158 {offsets = [0, 64], sizes = [8, 32], strides = [1, 1]} : vector<8x128xf32> to vector<8x32xf32>
    %162 = vector.extract_strided_slice %158 {offsets = [0, 96], sizes = [8, 32], strides = [1, 1]} : vector<8x128xf32> to vector<8x32xf32>
    %163 = arith.mulf %160, %144 : vector<8x32xf32>
    %164 = arith.mulf %159, %161 : vector<8x32xf32>
    %165 = arith.addf %163, %164 : vector<8x32xf32>
    %166 = math.tanh %165 : vector<8x32xf32>
    %167 = arith.mulf %162, %166 : vector<8x32xf32>
    %168 = vector.extract_strided_slice %5 {offsets = [56, 0], sizes = [8, 128], strides = [1, 1]} : vector<64x128xf32> to vector<8x128xf32>
    %169 = arith.truncf %167 : vector<8x32xf32> to vector<8x32xbf16>
    %cst_27 = arith.constant dense<0.000000e+00> : vector<8x128xf32>
    %170 = tpu.matmul %169, %6, %cst_27 {dimension_numbers = #tpu.dot_dimension_numbers<[1], [0], [0], [1], [0, 0, 1, 1], [], []>} : vector<8x32xbf16>, vector<32x128xbf16>, vector<8x128xf32> -> vector<8x128xf32>
    %171 = arith.addf %168, %170 : vector<8x128xf32>
    %172 = arith.mulf %171, %15 : vector<8x128xf32>
    %173 = arith.negf %172 : vector<8x128xf32>
    %174 = math.exp %173 : vector<8x128xf32>
    %cst_28 = arith.constant 1.000000e+00 : f32
    %175 = vector.broadcast %cst_28 : f32 to vector<8x128xf32>
    %176 = arith.addf %175, %174 : vector<8x128xf32>
    %177 = arith.divf %175, %176 : vector<8x128xf32>
    %178 = arith.mulf %177, %15 : vector<8x128xf32>
    %179 = arith.subf %178, %18 : vector<8x128xf32>
    %180 = vector.extract_strided_slice %179 {offsets = [0, 0], sizes = [8, 32], strides = [1, 1]} : vector<8x128xf32> to vector<8x32xf32>
    %181 = vector.extract_strided_slice %179 {offsets = [0, 32], sizes = [8, 32], strides = [1, 1]} : vector<8x128xf32> to vector<8x32xf32>
    %182 = vector.extract_strided_slice %179 {offsets = [0, 64], sizes = [8, 32], strides = [1, 1]} : vector<8x128xf32> to vector<8x32xf32>
    %183 = vector.extract_strided_slice %179 {offsets = [0, 96], sizes = [8, 32], strides = [1, 1]} : vector<8x128xf32> to vector<8x32xf32>
    %184 = arith.mulf %181, %165 : vector<8x32xf32>
    %185 = arith.mulf %180, %182 : vector<8x32xf32>
    %186 = arith.addf %184, %185 : vector<8x32xf32>
    %187 = math.tanh %186 : vector<8x32xf32>
    %188 = arith.mulf %183, %187 : vector<8x32xf32>
    %c0_29 = arith.constant 0 : index
    %c0_30 = arith.constant 0 : index
    %189 = vector.load %arg4[%c0_29, %c0_30] : memref<32x128xf32, #tpu.memory_space<vmem>>, vector<32x128xf32>
    %cst_31 = arith.constant dense<0.000000e+00> : vector<8x128xf32>
    %190 = tpu.matmul %188, %189, %cst_31 {dimension_numbers = #tpu.dot_dimension_numbers<[1], [0], [0], [1], [0, 0, 1, 1], [], []>} : vector<8x32xf32>, vector<32x128xf32>, vector<8x128xf32> -> vector<8x128xf32>
    %c0_32 = arith.constant 0 : index
    %c0_33 = arith.constant 0 : index
    %191 = vector.load %arg5[%c0_32, %c0_33] : memref<1x128xf32, #tpu.memory_space<vmem>>, vector<1x128xf32>
    %192 = vector.broadcast %191 : vector<1x128xf32> to vector<8x128xf32>
    %193 = arith.addf %190, %192 : vector<8x128xf32>
    %c0_34 = arith.constant 0 : index
    %c0_35 = arith.constant 0 : index
    %194 = vector.load %arg6[%c0_34, %c0_35] : memref<8x128xf32, #tpu.memory_space<vmem>>, vector<8x128xf32>
    tpu.vector_store %arg6[%c0_34, %c0_35], %193 {strides = array<i32>} : memref<8x128xf32, #tpu.memory_space<vmem>>, vector<8x128xf32>,
    return
  }
}

</mosaic_0001>

<llo_original>
// kernel: forward.1
$region0: #{forward.1}
  #allocation0 [shape = 'u32[]', space=smem, size = 0x4, offset = 0x4, fixed_abs, tag = 'smem constant byte address 0x4 - core index']
  #allocation1 [shape = 'u32[144,128]{1,0:T(1,128)}', space=vmem, size = 0x12000, scoped, tag = 'internal scratch']
  %s0 = inlined_call_operand.vmem [shape: f32[64,16], index: 0, kind: input, shape index: {}]
  %s1 = inlined_call_operand.vmem [shape: f32[16,128], index: 1, kind: input, shape index: {}]
  %s2 = inlined_call_operand.vmem [shape: bf16[32,128], index: 2, kind: input, shape index: {}]
  %s3 = inlined_call_operand.vmem [shape: f32[1,128], index: 3, kind: input, shape index: {}]
  %s4 = inlined_call_operand.vmem [shape: f32[32,128], index: 4, kind: input, shape index: {}]
  %s5 = inlined_call_operand.vmem [shape: f32[1,128], index: 5, kind: input, shape index: {}]
  %s6 = inlined_call_operand.vmem [shape: f32[8,128], index: 6, kind: output, shape index: {}]
  %s7 = sld [smem:[#allocation0]]
  $region34: #{forward.1} parent=0
    _
  %s9 = ssub.s32 1, %s7
  %s10 = scalar_select 0, %s9, %s7
  // Predicated region
  $region2: #{forward.1} parent=0 // pred_check
    _
  $region3: #{forward.1} parent=0 // pred_check_branch
    %12 = sbr.rel (0) target = $region5
  $region4: #{forward.1} parent=0 // pred_region
    _
  $region5: #{forward.1} parent=0 // pred_fallthru
    _
  // Predicated region
  $region6: #{forward.1} parent=0 // pred_check
    _
  $region7: #{forward.1} parent=0 // pred_check_branch
    %14 = sbr.rel (0) target = $region9
  $region8: #{forward.1} parent=0 // pred_region
    _
  $region9: #{forward.1} parent=0 // pred_fallthru
    _
  // Predicated region
  $region10: #{forward.1} parent=0 // pred_check
    _
  $region11: #{forward.1} parent=0 // pred_check_branch
    %16 = sbr.rel (0) target = $region13
  $region12: #{forward.1} parent=0 // pred_region
    _
  $region13: #{forward.1} parent=0 // pred_fallthru
    _
  // Predicated region
  $region14: #{forward.1} parent=0 // pred_check
    _
  $region15: #{forward.1} parent=0 // pred_check_branch
    %18 = sbr.rel (0) target = $region17
  $region16: #{forward.1} parent=0 // pred_region
    _
  $region17: #{forward.1} parent=0 // pred_fallthru
    _
  // Predicated region
  $region18: #{forward.1} parent=0 // pred_check
    _
  $region19: #{forward.1} parent=0 // pred_check_branch
    %20 = sbr.rel (0) target = $region21
  $region20: #{forward.1} parent=0 // pred_region
    _
  $region21: #{forward.1} parent=0 // pred_fallthru
    _
  // Predicated region
  $region22: #{forward.1} parent=0 // pred_check
    _
  $region23: #{forward.1} parent=0 // pred_check_branch
    %22 = sbr.rel (0) target = $region25
  $region24: #{forward.1} parent=0 // pred_region
    _
  $region25: #{forward.1} parent=0 // pred_fallthru
    _
  %v24 = vld [vmem:[%s0] sm:$0xff]
  %v25 = vld [vmem:[%s0 + $0x8] sm:$0xff]
  %v26 = vld [vmem:[%s0 + $0x10] sm:$0xff]
  %v27 = vld [vmem:[%s0 + $0x18] sm:$0xff]
  %v28 = vld [vmem:[%s0 + $0x20] sm:$0xff]
  %v29 = vld [vmem:[%s0 + $0x28] sm:$0xff]
  %v30 = vld [vmem:[%s0 + $0x30] sm:$0xff]
  %v31 = vld [vmem:[%s0 + $0x38] sm:$0xff]
  %v32 = vld [vmem:[%s1] sm:$0xff]
  %v33 = vld [vmem:[%s1 + $0x8] sm:$0xff]
  %v34 = vld [vmem:[%s3] sm:$0x1]
  %v36 = vlaneseq
  %v37 = vshrl.u32 %v36, 7
  %v38 = vsub.s32 0, %v37
  %v39 = vrot.slane %v34, %v38
  %vm41 = vcmask 130048
  %v43 = vsel %vm41, %v24, 0
  %v46 = vsel %vm41, %v25, 0
  %v49 = vsel %vm41, %v26, 0
  %v52 = vsel %vm41, %v27, 0
  %v55 = vsel %vm41, %v28, 0
  %v58 = vsel %vm41, %v29, 0
  %v61 = vsel %vm41, %v30, 0
  %v64 = vsel %vm41, %v31, 0
  %66 = vmatprep.subr.mxu0 0.0
  %67 = vmatpush1.msra.mxu0 0.0
  %68 = vmatprep.subr.mxu0 0.0
  %69 = vmatpush1.msra.mxu0 0.0
  %70 = vmatprep.subr.mxu0 0.0
  %71 = vmatpush1.msra.mxu0 0.0
  %72 = vmatprep.subr.mxu0 0.0
  %73 = vmatpush1.msra.mxu0 0.0
  %74 = vmatprep.subr.mxu0 0.0
  %75 = vmatpush1.msra.mxu0 0.0
  %76 = vmatprep.subr.mxu0 0.0
  %77 = vmatpush1.msra.mxu0 0.0
  %78 = vmatprep.subr.mxu0 0.0
  %79 = vmatpush1.msra.mxu0 0.0
  %80 = vmatprep.subr.mxu0 0.0
  %81 = vmatpush1.msra.mxu0 0.0
  %82 = vmatprep.subr.mxu0 0.0
  %83 = vmatpush1.msra.mxu0 0.0
  %84 = vmatprep.subr.mxu0 0.0
  %85 = vmatpush1.msra.mxu0 0.0
  %86 = vmatprep.subr.mxu0 0.0
  %87 = vmatpush1.msra.mxu0 0.0
  %88 = vmatprep.subr.mxu0 0.0
  %89 = vmatpush1.msra.mxu0 0.0
  %90 = vmatprep.subr.mxu0 0.0
  %91 = vmatpush1.msra.mxu0 0.0
  %92 = vmatprep.subr.mxu0 0.0
  %93 = vmatpush1.msra.mxu0 0.0
  %94 = vmatprep.subr.mxu0 0.0
  %95 = vmatpush1.msra.mxu0 %v33
  %96 = vmatprep.subr.mxu0 0.0
  %97 = vmatpush1.msra.mxu0 %v32
  %98 = vmatprep.subr.mxu0 0.0
  %99 = vmatpush2.msra.mxu0 0.0
  %100 = vmatprep.subr.mxu0 0.0
  %101 = vmatpush2.msra.mxu0 0.0
  %102 = vmatprep.subr.mxu0 0.0
  %103 = vmatpush2.msra.mxu0 0.0
  %104 = vmatprep.subr.mxu0 0.0
  %105 = vmatpush2.msra.mxu0 0.0
  %106 = vmatprep.subr.mxu0 0.0
  %107 = vmatpush2.msra.mxu0 0.0
  %108 = vmatprep.subr.mxu0 0.0
  %109 = vmatpush2.msra.mxu0 0.0
  %110 = vmatprep.subr.mxu0 0.0
  %111 = vmatpush2.msra.mxu0 0.0
  %112 = vmatprep.subr.mxu0 0.0
  %113 = vmatpush2.msra.mxu0 0.0
  %114 = vmatprep.subr.mxu0 0.0
  %115 = vmatpush2.msra.mxu0 0.0
  %116 = vmatprep.subr.mxu0 0.0
  %117 = vmatpush2.msra.mxu0 0.0
  %118 = vmatprep.subr.mxu0 0.0
  %119 = vmatpush2.msra.mxu0 0.0
  %120 = vmatprep.subr.mxu0 0.0
  %121 = vmatpush2.msra.mxu0 0.0
  %122 = vmatprep.subr.mxu0 0.0
  %123 = vmatpush2.msra.mxu0 0.0
  %124 = vmatprep.subr.mxu0 0.0
  %125 = vmatpush2.msra.mxu0 0.0
  %126 = vmatprep.subr.mxu0 0.0
  %127 = vmatpush2.msra.mxu0 0.0
  %128 = vmatprep.subr.mxu0 0.0
  %129 = vmatpush2.msra.mxu0 0.0
  %130 = vmatprep.mubr.f32.mxu0 0.0
  %131 = vmatmul.mubr.f32.gmra.mxu0 %v43
  %v132 = vpop.f32.mrf.mxu0
  %v133 = vadd.f32 %v39, %v132
  %v134 = vpop.f32.mrf.mxu0
  %135 = vmatprep.mubr.f32.mxu0 0.0
  %136 = vmatmul.mubr.f32.gmra.mxu0 %v46
  %v137 = vpop.f32.mrf.mxu0
  %v138 = vadd.f32 %v39, %v137
  %v139 = vpop.f32.mrf.mxu0
  %140 = vmatprep.mubr.f32.mxu0 0.0
  %141 = vmatmul.mubr.f32.gmra.mxu0 %v49
  %v142 = vpop.f32.mrf.mxu0
  %v143 = vadd.f32 %v39, %v142
  %v144 = vpop.f32.mrf.mxu0
  %145 = vmatprep.mubr.f32.mxu0 0.0
  %146 = vmatmul.mubr.f32.gmra.mxu0 %v52
  %v147 = vpop.f32.mrf.mxu0
  %v148 = vadd.f32 %v39, %v147
  %v149 = vpop.f32.mrf.mxu0
  %150 = vmatprep.mubr.f32.mxu0 0.0
  %151 = vmatmul.mubr.f32.gmra.mxu0 %v55
  %v152 = vpop.f32.mrf.mxu0
  %v153 = vadd.f32 %v39, %v152
  %v154 = vpop.f32.mrf.mxu0
  %155 = vmatprep.mubr.f32.mxu0 0.0
  %156 = vmatmul.mubr.f32.gmra.mxu0 %v58
  %v157 = vpop.f32.mrf.mxu0
  %v158 = vadd.f32 %v39, %v157
  %v159 = vpop.f32.mrf.mxu0
  %160 = vmatprep.mubr.f32.mxu0 0.0
  %161 = vmatmul.mubr.f32.gmra.mxu0 %v61
  %v162 = vpop.f32.mrf.mxu0
  %v163 = vadd.f32 %v39, %v162
  %v164 = vpop.f32.mrf.mxu0
  %165 = vmatprep.mubr.f32.mxu0 0.0
  %166 = vmatmul.mubr.f32.gmra.mxu0 %v64
  %v167 = vpop.f32.mrf.mxu0
  %v168 = vadd.f32 %v39, %v167
  %v169 = vpop.f32.mrf.mxu0
  %170 = vdwg.mxu0
  %v171 = vld [vmem:[%s2] sm:$0xf]
  %v172 = vld [vmem:[%s2 + $0x4] sm:$0xf]
  %v173 = vld [vmem:[%s2 + $0x8] sm:$0xf]
  %v174 = vld [vmem:[%s2 + $0xc] sm:$0xf]
  %v175 = vlaneseq
  %v176 = vand.u32 %v175, 127
  %vm177 = vcmp.ge.s32.totalorder %v176, 64
  %vm178 = vcmp.lt.s32.totalorder %v176, 96
  %vm179 = vmand %vm177, %vm178
  %v180 = vsel %vm179, 2.0, 1.0
  %v181 = vsel %vm179, 1.0, 0.0
  %v186 = vunpack.c.l.b16 %v171
  %v187 = vunpack.c.l.b16 %v172
  %v188 = vunpack.c.l.b16 %v173
  %v189 = vunpack.c.l.b16 %v174
  %v190 = vpack.c.b16 %v187, %v186
  %v191 = vpack.c.b16 %v189, %v188
  %vm194 = vcmask 261120
  %v196 = vsel %vm194, 0, 0
  %198 = vmatprep.subr.bf16.mxu0 0
  %199 = vmatpush1.bf16.msra.mxu0 0
  %200 = vmatprep.subr.bf16.mxu0 0
  %201 = vmatpush1.bf16.msra.mxu0 0
  %202 = vmatprep.subr.bf16.mxu0 0
  %203 = vmatpush1.bf16.msra.mxu0 0
  %204 = vmatprep.subr.bf16.mxu0 0
  %205 = vmatpush1.bf16.msra.mxu0 0
  %206 = vmatprep.subr.bf16.mxu0 0
  %207 = vmatpush1.bf16.msra.mxu0 0
  %208 = vmatprep.subr.bf16.mxu0 0
  %209 = vmatpush1.bf16.msra.mxu0 0
  %210 = vmatprep.subr.bf16.mxu0 0
  %211 = vmatpush1.bf16.msra.mxu0 %v191
  %212 = vmatprep.subr.bf16.mxu0 0
  %213 = vmatpush1.bf16.msra.mxu0 %v190
  %214 = vmatprep.subr.bf16.mxu0 0
  %215 = vmatpush2.bf16.msra.mxu0 0
  %216 = vmatprep.subr.bf16.mxu0 0
  %217 = vmatpush2.bf16.msra.mxu0 0
  %218 = vmatprep.subr.bf16.mxu0 0
  %219 = vmatpush2.bf16.msra.mxu0 0
  %220 = vmatprep.subr.bf16.mxu0 0
  %221 = vmatpush2.bf16.msra.mxu0 0
  %222 = vmatprep.subr.bf16.mxu0 0
  %223 = vmatpush2.bf16.msra.mxu0 0
  %224 = vmatprep.subr.bf16.mxu0 0
  %225 = vmatpush2.bf16.msra.mxu0 0
  %226 = vmatprep.subr.bf16.mxu0 0
  %227 = vmatpush2.bf16.msra.mxu0 0
  %228 = vmatprep.subr.bf16.mxu0 0
  %229 = vmatpush2.bf16.msra.mxu0 0
  %230 = vmatprep.mubr.bf16.mxu0 0
  %231 = vmatmul.mubr.bf16.gmra.mxu0 %v196
  %v232 = vpop.f32.mrf.mxu0
  %v233 = vadd.f32 0.0, %v232
  %v234 = vpop.f32.mrf.mxu0
  %v235 = vpop.f32.mrf.mxu0
  %v236 = vpop.f32.mrf.mxu0
  %237 = vdwg.mxu0
  %v238 = vadd.f32 %v133, %v233
  %v239 = vmul.f32 %v238, %v180
  %v240 = vxor.u32 %v239, 2147483648
  %v241 = vmul.f32 %v240, 1.442695
  %v242 = vpow.pop %v241
  %v243 = vadd.f32 %v242, 1.0
  %v244 = vrcp.pop %v243
  %v245 = vmul.f32 1.0, %v244
  %v246 = vmul.f32 %v245, %v180
  %v247 = vsub.f32 %v246, %v181
  %v248 = vmul.f32 %v247, 0.0
  %250 = vrot.lane.b32.xlu0 %v247, 64
  %v251 = vpop.permute.xlu0 %250
  %v253 = vmul.f32 %v247, %v251
  %255 = vrot.lane.b32.xlu0 %v253, 32
  %v256 = vpop.permute.xlu0 %255
  %v258 = vadd.f32 %v248, %v256
  %v259 = vtanh.pop %v258
  %261 = vrot.lane.b32.xlu0 %v259, 64
  %v262 = vpop.permute.xlu0 %261
  %v264 = vmul.f32 %v247, %v262
  %v265 = vpack.c.bf16 %v264, %v264
  %267 = vrot.lane.b32.xlu0 %v265, 32
  %v268 = vpop.permute.xlu0 %267
  %v270 = vsel %vm194, %v268, 0
  %272 = vmatprep.subr.bf16.mxu0 0
  %273 = vmatpush1.bf16.msra.mxu0 0
  %274 = vmatprep.subr.bf16.mxu0 0
  %275 = vmatpush1.bf16.msra.mxu0 0
  %276 = vmatprep.subr.bf16.mxu0 0
  %277 = vmatpush1.bf16.msra.mxu0 0
  %278 = vmatprep.subr.bf16.mxu0 0
  %279 = vmatpush1.bf16.msra.mxu0 0
  %280 = vmatprep.subr.bf16.mxu0 0
  %281 = vmatpush1.bf16.msra.mxu0 0
  %282 = vmatprep.subr.bf16.mxu0 0
  %283 = vmatpush1.bf16.msra.mxu0 0
  %284 = vmatprep.subr.bf16.mxu0 0
  %285 = vmatpush1.bf16.msra.mxu0 %v191
  %286 = vmatprep.subr.bf16.mxu0 0
  %287 = vmatpush1.bf16.msra.mxu0 %v190
  %288 = vmatprep.subr.bf16.mxu0 0
  %289 = vmatpush2.bf16.msra.mxu0 0
  %290 = vmatprep.subr.bf16.mxu0 0
  %291 = vmatpush2.bf16.msra.mxu0 0
  %292 = vmatprep.subr.bf16.mxu0 0
  %293 = vmatpush2.bf16.msra.mxu0 0
  %294 = vmatprep.subr.bf16.mxu0 0
  %295 = vmatpush2.bf16.msra.mxu0 0
  %296 = vmatprep.subr.bf16.mxu0 0
  %297 = vmatpush2.bf16.msra.mxu0 0
  %298 = vmatprep.subr.bf16.mxu0 0
  %299 = vmatpush2.bf16.msra.mxu0 0
  %300 = vmatprep.subr.bf16.mxu0 0
  %301 = vmatpush2.bf16.msra.mxu0 0
  %302 = vmatprep.subr.bf16.mxu0 0
  %303 = vmatpush2.bf16.msra.mxu0 0
  %304 = vmatprep.mubr.bf16.mxu0 0
  %305 = vmatmul.mubr.bf16.gmra.mxu0 %v270
  %v306 = vpop.f32.mrf.mxu0
  %v307 = vadd.f32 0.0, %v306
  %v308 = vpop.f32.mrf.mxu0
  %v309 = vpop.f32.mrf.mxu0
  %v310 = vpop.f32.mrf.mxu0
  %311 = vdwg.mxu0
  %v312 = vadd.f32 %v138, %v307
  %v313 = vmul.f32 %v312, %v180
  %v314 = vxor.u32 %v313, 2147483648
  %v315 = vmul.f32 %v314, 1.442695
  %v316 = vpow.pop %v315
  %v317 = vadd.f32 %v316, 1.0
  %v318 = vrcp.pop %v317
  %v319 = vmul.f32 1.0, %v318
  %v320 = vmul.f32 %v319, %v180
  %v321 = vsub.f32 %v320, %v181
  %v322 = vmul.f32 %v321, %v258
  %324 = vrot.lane.b32.xlu0 %v321, 64
  %v325 = vpop.permute.xlu0 %324
  %v327 = vmul.f32 %v321, %v325
  %329 = vrot.lane.b32.xlu0 %v327, 32
  %v330 = vpop.permute.xlu0 %329
  %v332 = vadd.f32 %v322, %v330
  %v333 = vtanh.pop %v332
  %335 = vrot.lane.b32.xlu0 %v333, 64
  %v336 = vpop.permute.xlu0 %335
  %v338 = vmul.f32 %v321, %v336
  %v339 = vpack.c.bf16 %v338, %v338
  %341 = vrot.lane.b32.xlu0 %v339, 32
  %v342 = vpop.permute.xlu0 %341
  %v344 = vsel %vm194, %v342, 0
  %346 = vmatprep.subr.bf16.mxu0 0
  %347 = vmatpush1.bf16.msra.mxu0 0
  %348 = vmatprep.subr.bf16.mxu0 0
  %349 = vmatpush1.bf16.msra.mxu0 0
  %350 = vmatprep.subr.bf16.mxu0 0
  %351 = vmatpush1.bf16.msra.mxu0 0
  %352 = vmatprep.subr.bf16.mxu0 0
  %353 = vmatpush1.bf16.msra.mxu0 0
  %354 = vmatprep.subr.bf16.mxu0 0
  %355 = vmatpush1.bf16.msra.mxu0 0
  %356 = vmatprep.subr.bf16.mxu0 0
  %357 = vmatpush1.bf16.msra.mxu0 0
  %358 = vmatprep.subr.bf16.mxu0 0
  %359 = vmatpush1.bf16.msra.mxu0 %v191
  %360 = vmatprep.subr.bf16.mxu0 0
  %361 = vmatpush1.bf16.msra.mxu0 %v190
  %362 = vmatprep.subr.bf16.mxu0 0
  %363 = vmatpush2.bf16.msra.mxu0 0
  %364 = vmatprep.subr.bf16.mxu0 0
  %365 = vmatpush2.bf16.msra.mxu0 0
  %366 = vmatprep.subr.bf16.mxu0 0
  %367 = vmatpush2.bf16.msra.mxu0 0
  %368 = vmatprep.subr.bf16.mxu0 0
  %369 = vmatpush2.bf16.msra.mxu0 0
  %370 = vmatprep.subr.bf16.mxu0 0
  %371 = vmatpush2.bf16.msra.mxu0 0
  %372 = vmatprep.subr.bf16.mxu0 0
  %373 = vmatpush2.bf16.msra.mxu0 0
  %374 = vmatprep.subr.bf16.mxu0 0
  %375 = vmatpush2.bf16.msra.mxu0 0
  %376 = vmatprep.subr.bf16.mxu0 0
  %377 = vmatpush2.bf16.msra.mxu0 0
  %378 = vmatprep.mubr.bf16.mxu0 0
  %379 = vmatmul.mubr.bf16.gmra.mxu0 %v344
  %v380 = vpop.f32.mrf.mxu0
  %v381 = vadd.f32 0.0, %v380
  %v382 = vpop.f32.mrf.mxu0
  %v383 = vpop.f32.mrf.mxu0
  %v384 = vpop.f32.mrf.mxu0
  %385 = vdwg.mxu0
  %v386 = vadd.f32 %v143, %v381
  %v387 = vmul.f32 %v386, %v180
  %v388 = vxor.u32 %v387, 2147483648
  %v389 = vmul.f32 %v388, 1.442695
  %v390 = vpow.pop %v389
  %v391 = vadd.f32 %v390, 1.0
  %v392 = vrcp.pop %v391
  %v393 = vmul.f32 1.0, %v392
  %v394 = vmul.f32 %v393, %v180
  %v395 = vsub.f32 %v394, %v181
  %v396 = vmul.f32 %v395, %v332
  %398 = vrot.lane.b32.xlu0 %v395, 64
  %v399 = vpop.permute.xlu0 %398
  %v401 = vmul.f32 %v395, %v399
  %403 = vrot.lane.b32.xlu0 %v401, 32
  %v404 = vpop.permute.xlu0 %403
  %v406 = vadd.f32 %v396, %v404
  %v407 = vtanh.pop %v406
  %409 = vrot.lane.b32.xlu0 %v407, 64
  %v410 = vpop.permute.xlu0 %409
  %v412 = vmul.f32 %v395, %v410
  %v413 = vpack.c.bf16 %v412, %v412
  %415 = vrot.lane.b32.xlu0 %v413, 32
  %v416 = vpop.permute.xlu0 %415
  %v418 = vsel %vm194, %v416, 0
  %420 = vmatprep.subr.bf16.mxu0 0
  %421 = vmatpush1.bf16.msra.mxu0 0
  %422 = vmatprep.subr.bf16.mxu0 0
  %423 = vmatpush1.bf16.msra.mxu0 0
  %424 = vmatprep.subr.bf16.mxu0 0
  %425 = vmatpush1.bf16.msra.mxu0 0
  %426 = vmatprep.subr.bf16.mxu0 0
  %427 = vmatpush1.bf16.msra.mxu0 0
  %428 = vmatprep.subr.bf16.mxu0 0
  %429 = vmatpush1.bf16.msra.mxu0 0
  %430 = vmatprep.subr.bf16.mxu0 0
  %431 = vmatpush1.bf16.msra.mxu0 0
  %432 = vmatprep.subr.bf16.mxu0 0
  %433 = vmatpush1.bf16.msra.mxu0 %v191
  %434 = vmatprep.subr.bf16.mxu0 0
  %435 = vmatpush1.bf16.msra.mxu0 %v190
  %436 = vmatprep.subr.bf16.mxu0 0
  %437 = vmatpush2.bf16.msra.mxu0 0
  %438 = vmatprep.subr.bf16.mxu0 0
  %439 = vmatpush2.bf16.msra.mxu0 0
  %440 = vmatprep.subr.bf16.mxu0 0
  %441 = vmatpush2.bf16.msra.mxu0 0
  %442 = vmatprep.subr.bf16.mxu0 0
  %443 = vmatpush2.bf16.msra.mxu0 0
  %444 = vmatprep.subr.bf16.mxu0 0
  %445 = vmatpush2.bf16.msra.mxu0 0
  %446 = vmatprep.subr.bf16.mxu0 0
  %447 = vmatpush2.bf16.msra.mxu0 0
  %448 = vmatprep.subr.bf16.mxu0 0
  %449 = vmatpush2.bf16.msra.mxu0 0
  %450 = vmatprep.subr.bf16.mxu0 0
  %451 = vmatpush2.bf16.msra.mxu0 0
  %452 = vmatprep.mubr.bf16.mxu0 0
  %453 = vmatmul.mubr.bf16.gmra.mxu0 %v418
  %v454 = vpop.f32.mrf.mxu0
  %v455 = vadd.f32 0.0, %v454
  %v456 = vpop.f32.mrf.mxu0
  %v457 = vpop.f32.mrf.mxu0
  %v458 = vpop.f32.mrf.mxu0
  %459 = vdwg.mxu0
  %v460 = vadd.f32 %v148, %v455
  %v461 = vmul.f32 %v460, %v180
  %v462 = vxor.u32 %v461, 2147483648
  %v463 = vmul.f32 %v462, 1.442695
  %v464 = vpow.pop %v463
  %v465 = vadd.f32 %v464, 1.0
  %v466 = vrcp.pop %v465
  %v467 = vmul.f32 1.0, %v466
  %v468 = vmul.f32 %v467, %v180
  %v469 = vsub.f32 %v468, %v181
  %v470 = vmul.f32 %v469, %v406
  %472 = vrot.lane.b32.xlu0 %v469, 64
  %v473 = vpop.permute.xlu0 %472
  %v475 = vmul.f32 %v469, %v473
  %477 = vrot.lane.b32.xlu0 %v475, 32
  %v478 = vpop.permute.xlu0 %477
  %v480 = vadd.f32 %v470, %v478
  %v481 = vtanh.pop %v480
  %483 = vrot.lane.b32.xlu0 %v481, 64
  %v484 = vpop.permute.xlu0 %483
  %v486 = vmul.f32 %v469, %v484
  %v487 = vpack.c.bf16 %v486, %v486
  %489 = vrot.lane.b32.xlu0 %v487, 32
  %v490 = vpop.permute.xlu0 %489
  %v492 = vsel %vm194, %v490, 0
  %494 = vmatprep.subr.bf16.mxu0 0
  %495 = vmatpush1.bf16.msra.mxu0 0
  %496 = vmatprep.subr.bf16.mxu0 0
  %497 = vmatpush1.bf16.msra.mxu0 0
  %498 = vmatprep.subr.bf16.mxu0 0
  %499 = vmatpush1.bf16.msra.mxu0 0
  %500 = vmatprep.subr.bf16.mxu0 0
  %501 = vmatpush1.bf16.msra.mxu0 0
  %502 = vmatprep.subr.bf16.mxu0 0
  %503 = vmatpush1.bf16.msra.mxu0 0
  %504 = vmatprep.subr.bf16.mxu0 0
  %505 = vmatpush1.bf16.msra.mxu0 0
  %506 = vmatprep.subr.bf16.mxu0 0
  %507 = vmatpush1.bf16.msra.mxu0 %v191
  %508 = vmatprep.subr.bf16.mxu0 0
  %509 = vmatpush1.bf16.msra.mxu0 %v190
  %510 = vmatprep.subr.bf16.mxu0 0
  %511 = vmatpush2.bf16.msra.mxu0 0
  %512 = vmatprep.subr.bf16.mxu0 0
  %513 = vmatpush2.bf16.msra.mxu0 0
  %514 = vmatprep.subr.bf16.mxu0 0
  %515 = vmatpush2.bf16.msra.mxu0 0
  %516 = vmatprep.subr.bf16.mxu0 0
  %517 = vmatpush2.bf16.msra.mxu0 0
  %518 = vmatprep.subr.bf16.mxu0 0
  %519 = vmatpush2.bf16.msra.mxu0 0
  %520 = vmatprep.subr.bf16.mxu0 0
  %521 = vmatpush2.bf16.msra.mxu0 0
  %522 = vmatprep.subr.bf16.mxu0 0
  %523 = vmatpush2.bf16.msra.mxu0 0
  %524 = vmatprep.subr.bf16.mxu0 0
  %525 = vmatpush2.bf16.msra.mxu0 0
  %526 = vmatprep.mubr.bf16.mxu0 0
  %527 = vmatmul.mubr.bf16.gmra.mxu0 %v492
  %v528 = vpop.f32.mrf.mxu0
  %v529 = vadd.f32 0.0, %v528
  %v530 = vpop.f32.mrf.mxu0
  %v531 = vpop.f32.mrf.mxu0
  %v532 = vpop.f32.mrf.mxu0
  %533 = vdwg.mxu0
  %v534 = vadd.f32 %v153, %v529
  %v535 = vmul.f32 %v534, %v180
  %v536 = vxor.u32 %v535, 2147483648
  %v537 = vmul.f32 %v536, 1.442695
  %v538 = vpow.pop %v537
  %v539 = vadd.f32 %v538, 1.0
  %v540 = vrcp.pop %v539
  %v541 = vmul.f32 1.0, %v540
  %v542 = vmul.f32 %v541, %v180
  %v543 = vsub.f32 %v542, %v181
  %v544 = vmul.f32 %v543, %v480
  %546 = vrot.lane.b32.xlu0 %v543, 64
  %v547 = vpop.permute.xlu0 %546
  %v549 = vmul.f32 %v543, %v547
  %551 = vrot.lane.b32.xlu0 %v549, 32
  %v552 = vpop.permute.xlu0 %551
  %v554 = vadd.f32 %v544, %v552
  %v555 = vtanh.pop %v554
  %557 = vrot.lane.b32.xlu0 %v555, 64
  %v558 = vpop.permute.xlu0 %557
  %v560 = vmul.f32 %v543, %v558
  %v561 = vpack.c.bf16 %v560, %v560
  %563 = vrot.lane.b32.xlu0 %v561, 32
  %v564 = vpop.permute.xlu0 %563
  %v566 = vsel %vm194, %v564, 0
  %568 = vmatprep.subr.bf16.mxu0 0
  %569 = vmatpush1.bf16.msra.mxu0 0
  %570 = vmatprep.subr.bf16.mxu0 0
  %571 = vmatpush1.bf16.msra.mxu0 0
  %572 = vmatprep.subr.bf16.mxu0 0
  %573 = vmatpush1.bf16.msra.mxu0 0
  %574 = vmatprep.subr.bf16.mxu0 0
  %575 = vmatpush1.bf16.msra.mxu0 0
  %576 = vmatprep.subr.bf16.mxu0 0
  %577 = vmatpush1.bf16.msra.mxu0 0
  %578 = vmatprep.subr.bf16.mxu0 0
  %579 = vmatpush1.bf16.msra.mxu0 0
  %580 = vmatprep.subr.bf16.mxu0 0
  %581 = vmatpush1.bf16.msra.mxu0 %v191
  %582 = vmatprep.subr.bf16.mxu0 0
  %583 = vmatpush1.bf16.msra.mxu0 %v190
  %584 = vmatprep.subr.bf16.mxu0 0
  %585 = vmatpush2.bf16.msra.mxu0 0
  %586 = vmatprep.subr.bf16.mxu0 0
  %587 = vmatpush2.bf16.msra.mxu0 0
  %588 = vmatprep.subr.bf16.mxu0 0
  %589 = vmatpush2.bf16.msra.mxu0 0
  %590 = vmatprep.subr.bf16.mxu0 0
  %591 = vmatpush2.bf16.msra.mxu0 0
  %592 = vmatprep.subr.bf16.mxu0 0
  %593 = vmatpush2.bf16.msra.mxu0 0
  %594 = vmatprep.subr.bf16.mxu0 0
  %595 = vmatpush2.bf16.msra.mxu0 0
  %596 = vmatprep.subr.bf16.mxu0 0
  %597 = vmatpush2.bf16.msra.mxu0 0
  %598 = vmatprep.subr.bf16.mxu0 0
  %599 = vmatpush2.bf16.msra.mxu0 0
  %600 = vmatprep.mubr.bf16.mxu0 0
  %601 = vmatmul.mubr.bf16.gmra.mxu0 %v566
  %v602 = vpop.f32.mrf.mxu0
  %v603 = vadd.f32 0.0, %v602
  %v604 = vpop.f32.mrf.mxu0
  %v605 = vpop.f32.mrf.mxu0
  %v606 = vpop.f32.mrf.mxu0
  %607 = vdwg.mxu0
  %v608 = vadd.f32 %v158, %v603
  %v609 = vmul.f32 %v608, %v180
  %v610 = vxor.u32 %v609, 2147483648
  %v611 = vmul.f32 %v610, 1.442695
  %v612 = vpow.pop %v611
  %v613 = vadd.f32 %v612, 1.0
  %v614 = vrcp.pop %v613
  %v615 = vmul.f32 1.0, %v614
  %v616 = vmul.f32 %v615, %v180
  %v617 = vsub.f32 %v616, %v181
  %v618 = vmul.f32 %v617, %v554
  %620 = vrot.lane.b32.xlu0 %v617, 64
  %v621 = vpop.permute.xlu0 %620
  %v623 = vmul.f32 %v617, %v621
  %625 = vrot.lane.b32.xlu0 %v623, 32
  %v626 = vpop.permute.xlu0 %625
  %v628 = vadd.f32 %v618, %v626
  %v629 = vtanh.pop %v628
  %631 = vrot.lane.b32.xlu0 %v629, 64
  %v632 = vpop.permute.xlu0 %631
  %v634 = vmul.f32 %v617, %v632
  %v635 = vpack.c.bf16 %v634, %v634
  %637 = vrot.lane.b32.xlu0 %v635, 32
  %v638 = vpop.permute.xlu0 %637
  %v640 = vsel %vm194, %v638, 0
  %642 = vmatprep.subr.bf16.mxu0 0
  %643 = vmatpush1.bf16.msra.mxu0 0
  %644 = vmatprep.subr.bf16.mxu0 0
  %645 = vmatpush1.bf16.msra.mxu0 0
  %646 = vmatprep.subr.bf16.mxu0 0
  %647 = vmatpush1.bf16.msra.mxu0 0
  %648 = vmatprep.subr.bf16.mxu0 0
  %649 = vmatpush1.bf16.msra.mxu0 0
  %650 = vmatprep.subr.bf16.mxu0 0
  %651 = vmatpush1.bf16.msra.mxu0 0
  %652 = vmatprep.subr.bf16.mxu0 0
  %653 = vmatpush1.bf16.msra.mxu0 0
  %654 = vmatprep.subr.bf16.mxu0 0
  %655 = vmatpush1.bf16.msra.mxu0 %v191
  %656 = vmatprep.subr.bf16.mxu0 0
  %657 = vmatpush1.bf16.msra.mxu0 %v190
  %658 = vmatprep.subr.bf16.mxu0 0
  %659 = vmatpush2.bf16.msra.mxu0 0
  %660 = vmatprep.subr.bf16.mxu0 0
  %661 = vmatpush2.bf16.msra.mxu0 0
  %662 = vmatprep.subr.bf16.mxu0 0
  %663 = vmatpush2.bf16.msra.mxu0 0
  %664 = vmatprep.subr.bf16.mxu0 0
  %665 = vmatpush2.bf16.msra.mxu0 0
  %666 = vmatprep.subr.bf16.mxu0 0
  %667 = vmatpush2.bf16.msra.mxu0 0
  %668 = vmatprep.subr.bf16.mxu0 0
  %669 = vmatpush2.bf16.msra.mxu0 0
  %670 = vmatprep.subr.bf16.mxu0 0
  %671 = vmatpush2.bf16.msra.mxu0 0
  %672 = vmatprep.subr.bf16.mxu0 0
  %673 = vmatpush2.bf16.msra.mxu0 0
  %674 = vmatprep.mubr.bf16.mxu0 0
  %675 = vmatmul.mubr.bf16.gmra.mxu0 %v640
  %v676 = vpop.f32.mrf.mxu0
  %v677 = vadd.f32 0.0, %v676
  %v678 = vpop.f32.mrf.mxu0
  %v679 = vpop.f32.mrf.mxu0
  %v680 = vpop.f32.mrf.mxu0
  %681 = vdwg.mxu0
  %v682 = vadd.f32 %v163, %v677
  %v683 = vmul.f32 %v682, %v180
  %v684 = vxor.u32 %v683, 2147483648
  %v685 = vmul.f32 %v684, 1.442695
  %v686 = vpow.pop %v685
  %v687 = vadd.f32 %v686, 1.0
  %v688 = vrcp.pop %v687
  %v689 = vmul.f32 1.0, %v688
  %v690 = vmul.f32 %v689, %v180
  %v691 = vsub.f32 %v690, %v181
  %v692 = vmul.f32 %v691, %v628
  %694 = vrot.lane.b32.xlu0 %v691, 64
  %v695 = vpop.permute.xlu0 %694
  %v697 = vmul.f32 %v691, %v695
  %699 = vrot.lane.b32.xlu0 %v697, 32
  %v700 = vpop.permute.xlu0 %699
  %v702 = vadd.f32 %v692, %v700
  %v703 = vtanh.pop %v702
  %705 = vrot.lane.b32.xlu0 %v703, 64
  %v706 = vpop.permute.xlu0 %705
  %v708 = vmul.f32 %v691, %v706
  %v709 = vpack.c.bf16 %v708, %v708
  %711 = vrot.lane.b32.xlu0 %v709, 32
  %v712 = vpop.permute.xlu0 %711
  %v714 = vsel %vm194, %v712, 0
  %716 = vmatprep.subr.bf16.mxu0 0
  %717 = vmatpush1.bf16.msra.mxu0 0
  %718 = vmatprep.subr.bf16.mxu0 0
  %719 = vmatpush1.bf16.msra.mxu0 0
  %720 = vmatprep.subr.bf16.mxu0 0
  %721 = vmatpush1.bf16.msra.mxu0 0
  %722 = vmatprep.subr.bf16.mxu0 0
  %723 = vmatpush1.bf16.msra.mxu0 0
  %724 = vmatprep.subr.bf16.mxu0 0
  %725 = vmatpush1.bf16.msra.mxu0 0
  %726 = vmatprep.subr.bf16.mxu0 0
  %727 = vmatpush1.bf16.msra.mxu0 0
  %728 = vmatprep.subr.bf16.mxu0 0
  %729 = vmatpush1.bf16.msra.mxu0 %v191
  %730 = vmatprep.subr.bf16.mxu0 0
  %731 = vmatpush1.bf16.msra.mxu0 %v190
  %732 = vmatprep.subr.bf16.mxu0 0
  %733 = vmatpush2.bf16.msra.mxu0 0
  %734 = vmatprep.subr.bf16.mxu0 0
  %735 = vmatpush2.bf16.msra.mxu0 0
  %736 = vmatprep.subr.bf16.mxu0 0
  %737 = vmatpush2.bf16.msra.mxu0 0
  %738 = vmatprep.subr.bf16.mxu0 0
  %739 = vmatpush2.bf16.msra.mxu0 0
  %740 = vmatprep.subr.bf16.mxu0 0
  %741 = vmatpush2.bf16.msra.mxu0 0
  %742 = vmatprep.subr.bf16.mxu0 0
  %743 = vmatpush2.bf16.msra.mxu0 0
  %744 = vmatprep.subr.bf16.mxu0 0
  %745 = vmatpush2.bf16.msra.mxu0 0
  %746 = vmatprep.subr.bf16.mxu0 0
  %747 = vmatpush2.bf16.msra.mxu0 0
  %748 = vmatprep.mubr.bf16.mxu0 0
  %749 = vmatmul.mubr.bf16.gmra.mxu0 %v714
  %v750 = vpop.f32.mrf.mxu0
  %v751 = vadd.f32 0.0, %v750
  %v752 = vpop.f32.mrf.mxu0
  %v753 = vpop.f32.mrf.mxu0
  %v754 = vpop.f32.mrf.mxu0
  %755 = vdwg.mxu0
  %v756 = vadd.f32 %v168, %v751
  %v757 = vmul.f32 %v756, %v180
  %v758 = vxor.u32 %v757, 2147483648
  %v759 = vmul.f32 %v758, 1.442695
  %v760 = vpow.pop %v759
  %v761 = vadd.f32 %v760, 1.0
  %v762 = vrcp.pop %v761
  %v763 = vmul.f32 1.0, %v762
  %v764 = vmul.f32 %v763, %v180
  %v765 = vsub.f32 %v764, %v181
  %v766 = vmul.f32 %v765, %v702
  %768 = vrot.lane.b32.xlu0 %v765, 64
  %v769 = vpop.permute.xlu0 %768
  %v771 = vmul.f32 %v765, %v769
  %773 = vrot.lane.b32.xlu0 %v771, 32
  %v774 = vpop.permute.xlu0 %773
  %v776 = vadd.f32 %v766, %v774
  %v777 = vtanh.pop %v776
  %779 = vrot.lane.b32.xlu0 %v777, 64
  %v780 = vpop.permute.xlu0 %779
  %v782 = vmul.f32 %v765, %v780
  %v783 = vld [vmem:[%s4] sm:$0xff]
  %v784 = vld [vmem:[%s4 + $0x8] sm:$0xff]
  %v785 = vld [vmem:[%s4 + $0x10] sm:$0xff]
  %v786 = vld [vmem:[%s4 + $0x18] sm:$0xff]
  %v787 = vld [vmem:[%s5] sm:$0x1]
  %v789 = vlaneseq
  %v790 = vshrl.u32 %v789, 7
  %v791 = vsub.s32 0, %v790
  %v792 = vrot.slane %v787, %v791
  %795 = vrot.lane.b32.xlu0 %v782, 32
  %v796 = vpop.permute.xlu0 %795
  %v797 = vsel %vm194, %v796, 0
  %799 = vmatprep.subr.mxu0 0.0
  %800 = vmatpush1.msra.mxu0 0.0
  %801 = vmatprep.subr.mxu0 0.0
  %802 = vmatpush1.msra.mxu0 0.0
  %803 = vmatprep.subr.mxu0 0.0
  %804 = vmatpush1.msra.mxu0 0.0
  %805 = vmatprep.subr.mxu0 0.0
  %806 = vmatpush1.msra.mxu0 0.0
  %807 = vmatprep.subr.mxu0 0.0
  %808 = vmatpush1.msra.mxu0 0.0
  %809 = vmatprep.subr.mxu0 0.0
  %810 = vmatpush1.msra.mxu0 0.0
  %811 = vmatprep.subr.mxu0 0.0
  %812 = vmatpush1.msra.mxu0 0.0
  %813 = vmatprep.subr.mxu0 0.0
  %814 = vmatpush1.msra.mxu0 0.0
  %815 = vmatprep.subr.mxu0 0.0
  %816 = vmatpush1.msra.mxu0 0.0
  %817 = vmatprep.subr.mxu0 0.0
  %818 = vmatpush1.msra.mxu0 0.0
  %819 = vmatprep.subr.mxu0 0.0
  %820 = vmatpush1.msra.mxu0 0.0
  %821 = vmatprep.subr.mxu0 0.0
  %822 = vmatpush1.msra.mxu0 0.0
  %823 = vmatprep.subr.mxu0 0.0
  %824 = vmatpush1.msra.mxu0 %v786
  %825 = vmatprep.subr.mxu0 0.0
  %826 = vmatpush1.msra.mxu0 %v785
  %827 = vmatprep.subr.mxu0 0.0
  %828 = vmatpush1.msra.mxu0 %v784
  %829 = vmatprep.subr.mxu0 0.0
  %830 = vmatpush1.msra.mxu0 %v783
  %831 = vmatprep.subr.mxu0 0.0
  %832 = vmatpush2.msra.mxu0 0.0
  %833 = vmatprep.subr.mxu0 0.0
  %834 = vmatpush2.msra.mxu0 0.0
  %835 = vmatprep.subr.mxu0 0.0
  %836 = vmatpush2.msra.mxu0 0.0
  %837 = vmatprep.subr.mxu0 0.0
  %838 = vmatpush2.msra.mxu0 0.0
  %839 = vmatprep.subr.mxu0 0.0
  %840 = vmatpush2.msra.mxu0 0.0
  %841 = vmatprep.subr.mxu0 0.0
  %842 = vmatpush2.msra.mxu0 0.0
  %843 = vmatprep.subr.mxu0 0.0
  %844 = vmatpush2.msra.mxu0 0.0
  %845 = vmatprep.subr.mxu0 0.0
  %846 = vmatpush2.msra.mxu0 0.0
  %847 = vmatprep.subr.mxu0 0.0
  %848 = vmatpush2.msra.mxu0 0.0
  %849 = vmatprep.subr.mxu0 0.0
  %850 = vmatpush2.msra.mxu0 0.0
  %851 = vmatprep.subr.mxu0 0.0
  %852 = vmatpush2.msra.mxu0 0.0
  %853 = vmatprep.subr.mxu0 0.0
  %854 = vmatpush2.msra.mxu0 0.0
  %855 = vmatprep.subr.mxu0 0.0
  %856 = vmatpush2.msra.mxu0 0.0
  %857 = vmatprep.subr.mxu0 0.0
  %858 = vmatpush2.msra.mxu0 0.0
  %859 = vmatprep.subr.mxu0 0.0
  %860 = vmatpush2.msra.mxu0 0.0
  %861 = vmatprep.subr.mxu0 0.0
  %862 = vmatpush2.msra.mxu0 0.0
  %863 = vmatprep.mubr.f32.mxu0 0.0
  %864 = vmatmul.mubr.f32.gmra.mxu0 %v797
  %v865 = vpop.f32.mrf.mxu0
  %v866 = vadd.f32 %v792, %v865
  %v867 = vpop.f32.mrf.mxu0
  %868 = vdwg.mxu0
  %869 = vst [vmem:[%s6] sm:$0xff] %v866
  // Predicated region
  $region26: #{forward.1} parent=0 // pred_check
    _
  $region27: #{forward.1} parent=0 // pred_check_branch
    %871 = sbr.rel (0) target = $region29
  $region28: #{forward.1} parent=0 // pred_region
    _
  $region29: #{forward.1} parent=0 // pred_fallthru
    _
  // Predicated region
  $region30: #{forward.1} parent=0 // pred_check
    _
  $region31: #{forward.1} parent=0 // pred_check_branch
    %873 = sbr.rel (0) target = $region33
  $region32: #{forward.1} parent=0 // pred_region
    _
  $region33: #{forward.1} parent=0 // pred_fallthru
    _

</llo_original>
